<compile_context>
chip_gen: v5e
topology: v5e:2x2
jax: 0.10.0
libtpu: 0.0.40
codegen_flags: <defaults>
</compile_context>

<pallas_src>
import jax
import jax.numpy as jnp
from jax.experimental import pallas as pl
from jax.experimental.pallas import tpu as pltpu


def _identity_kernel(x_ref, o_ref):
    # Pure pass-through: copy the VMEM input tile to the output tile.
    o_ref[...] = x_ref[...]


def _pick_lane_width(total: int) -> int | None:
    """Widest 128-multiple lane width (<= 2048) that exactly divides `total`."""
    for cand in (2048, 1024, 512, 256, 128):
        if total % cand == 0:
            return cand
    return None


def _pick_tile_rows(rows: int, lane: int, itemsize: int,
                    target_block_bytes: int) -> int:
    """Largest row-tile that (a) fits the byte budget, (b) divides `rows`,
    and (c) respects the dtype sublane multiple (unless it is the full extent)."""
    sublane = {4: 8, 2: 16, 1: 32}.get(itemsize, 8)
    max_rows = max(sublane, target_block_bytes // (lane * itemsize))
    if rows <= max_rows:
        # Full row extent -> exempt from the sublane-divisibility rule.
        return rows
    best = None
    t = sublane
    while t <= max_rows:
        if rows % t == 0:
            best = t
        t += sublane
    if best is None:
        # TODO(synk): rows not divisible by the sublane multiple under the
        # byte budget; fall back to a single whole-array block.
        return rows
    return best


def base_model_predict(x: jax.Array,
                       *,
                       target_block_bytes: int = 2 * 1024 * 1024,
                       donate: bool = False) -> jax.Array:
    """Pallas implementation of BaseModel.predict(data) == forward(data) (identity).

    x: arbitrary-rank array (e.g. NCHW).  The kernel is a lane-dense,
    VMEM-budget-tiled HBM copy; subclasses would replace the kernel body.
    """
    orig_shape = x.shape
    total = x.size
    itemsize = jnp.dtype(x.dtype).itemsize

    lane = _pick_lane_width(total)
    if lane is None or total == 0:
        # TODO(synk): element count has no 128-multiple factorization; for the
        # abstract base class the identity is returned directly (no kernel).
        return x

    rows = total // lane
    x2d = x.reshape(rows, lane)

    tile_rows = _pick_tile_rows(rows, lane, itemsize, target_block_bytes)
    assert rows % tile_rows == 0
    grid = (rows // tile_rows,)

    # VMEM budget: double-buffered input + output blocks, plus headroom.
    # Cap below v7x's 64 MiB physical VMEM; floor at the smallest default
    # scoped limit across generations (16 MiB on v5e).
    tile_bytes = tile_rows * lane * itemsize
    vmem_limit = min(48 << 20, max(4 * tile_bytes + (2 << 20), 16 << 20))

    out2d = pl.pallas_call(
        _identity_kernel,
        out_shape=jax.ShapeDtypeStruct((rows, lane), x2d.dtype),
        grid_spec=pltpu.PrefetchScalarGridSpec(
            num_scalar_prefetch=0,
            grid=grid,
            in_specs=[pl.BlockSpec((tile_rows, lane), lambda i: (i, 0))],
            out_specs=pl.BlockSpec((tile_rows, lane), lambda i: (i, 0)),
        ),
        compiler_params=pltpu.CompilerParams(
            dimension_semantics=("parallel",),
            vmem_limit_bytes=vmem_limit,
        ),
        # For a literal identity, aliasing avoids a second HBM allocation
        # (but donates the input buffer).
        input_output_aliases={0: 0} if donate else {},
    )(x2d)

    return out2d.reshape(orig_shape)


if __name__ == "__main__":
    key = jax.random.PRNGKey(0)
    # Small NCHW input consistent with a generic graph/vision model data tensor.
    x = jax.random.normal(key, (2, 4, 16, 16), dtype=jnp.float32)

    y = base_model_predict(x)
    jax.block_until_ready(y)

    # Sanity: pass-through must be exact.
    assert y.shape == x.shape
    assert y.dtype == x.dtype
    assert bool(jnp.all(y == x))

    print("KERNEL_OK")
</pallas_src>

<mosaic_0001>
module attributes {stable_mosaic.version = 11 : i64} {
  func.func @_identity_kernel(%arg0: i32, %arg1: memref<1x2048xf32, #tpu.memory_space<vmem>>, %arg2: memref<1x2048xf32, #tpu.memory_space<vmem>>) attributes {dimension_semantics = [#tpu.dimension_semantics<parallel>], iteration_bounds = array<i64: 1>, scalar_prefetch = 0 : i64, scratch_operands = 0 : i64, tpu.core_type = #tpu.core_type<tc>, window_params = [{transform_indices = @transform_0, window_bounds = array<i64: 1, 2048>}, {transform_indices = @transform_1, window_bounds = array<i64: 1, 2048>}]} {
    %c0 = arith.constant 0 : index
    %c0_0 = arith.constant 0 : index
    %0 = vector.load %arg1[%c0, %c0_0] : memref<1x2048xf32, #tpu.memory_space<vmem>>, vector<1x2048xf32>
    %c0_1 = arith.constant 0 : index
    %c0_2 = arith.constant 0 : index
    %1 = vector.load %arg2[%c0_1, %c0_2] : memref<1x2048xf32, #tpu.memory_space<vmem>>, vector<1x2048xf32>
    tpu.vector_store %arg2[%c0_1, %c0_2], %0 {strides = array<i32>} : memref<1x2048xf32, #tpu.memory_space<vmem>>, vector<1x2048xf32>,
    return
  }
  func.func @transform_0(%arg0: i32) -> (i32, i32) {
    %c0_i32 = arith.constant 0 : i32
    %c0_i32_0 = arith.constant 0 : i32
    return %arg0, %c0_i32 : i32, i32
  }
  func.func @transform_1(%arg0: i32) -> (i32, i32) {
    %c0_i32 = arith.constant 0 : i32
    %c0_i32_0 = arith.constant 0 : i32
    return %arg0, %c0_i32 : i32, i32
  }
}

</mosaic_0001>

<llo_original>
// kernel: tpu_custom_call.1
$region0: #{tpu_custom_call.1}
  #allocation0 [shape = 'u32[]', space=smem, size = 0x4, offset = 0x4, fixed_abs, tag = 'smem constant byte address 0x4 - core index']
  #allocation1 [shape = 'u32[72,128]{1,0:T(1,128)}', space=vmem, size = 0x9000, scoped, tag = 'internal scratch']
  %s0 = inlined_call_operand.hbm [shape: f32[1,2048], index: 0, kind: input, shape index: {}]
  %s1 = inlined_call_operand.hbm [shape: f32[1,2048], index: 1, kind: output, shape index: {}]
  %s2 = sld [smem:[#allocation0]]
  $region18: #{tpu_custom_call.1} parent=0
    _
  %s4 = ssub.s32 1, %s2
  %s5 = scalar_select 0, %s4, %s2
  $region1: #{tpu_custom_call.1} parent=0
    #allocation2 [shape = 'u8[8192]{0}', space=vmem, size = 0x2000, scoped, tag = 'input window, operand 0, single buffered']
    #allocation3 [shape = 's32[1]{0}', space=sflag, size = 0x4, scoped, tag = 'scoped memory for tpu_custom_call.1']
    #allocation4 [shape = 's32[1]{0}', space=sflag, size = 0x4, scoped, tag = 'scoped memory for tpu_custom_call.1']
    #allocation5 [shape = 'u8[8192]{0}', space=vmem, size = 0x2000, scoped, tag = 'output window, operand 0, single buffered']
    %6 = vsyncpa [#allocation3], 0
    %7 = vsyncpa [#allocation4], 0
    // Predicated region
    $region2: #{tpu_custom_call.1} parent=1 // pred_check
      _
    $region3: #{tpu_custom_call.1} parent=1 // pred_check_branch
      %9 = sbr.rel (0) target = $region5
    $region4: #{tpu_custom_call.1} parent=1 // pred_region
      %11 = vsyncadd [#allocation3], 0
      %s13 = sshll.u32 %s0, 4
      %s14 = int_to_ptr.hbm [resolvable:$true] %s13
      %s15 = sshll.u32 [#allocation2], 4
      %s16 = int_to_ptr.vmem [resolvable:$true] %s15
      %18 = dma.hbm_to_vmem [thread:$0]  %s14, 256, %s16, [#allocation3]
    $region5: #{tpu_custom_call.1} parent=1 // pred_fallthru
      _
    // Predicated region
    $region6: #{tpu_custom_call.1} parent=1 // pred_check
      _
    $region7: #{tpu_custom_call.1} parent=1 // pred_check_branch
      %20 = sbr.rel (0) target = $region9
    $region8: #{tpu_custom_call.1} parent=1 // pred_region
      %22 = dma.done [#allocation3], 256
    $region9: #{tpu_custom_call.1} parent=1 // pred_fallthru
      _
    %v23 = vld [vmem:[#allocation2] sm:$0xff]
    %v24 = vld [vmem:[#allocation2 + $0x8] sm:$0xff]
    %25 = vst [vmem:[#allocation5] sm:$0xff] %v23
    %26 = vst [vmem:[#allocation5 + $0x8] sm:$0xff] %v24
    // Predicated region
    $region10: #{tpu_custom_call.1} parent=1 // pred_check
      _
    $region11: #{tpu_custom_call.1} parent=1 // pred_check_branch
      %28 = sbr.rel (0) target = $region13
    $region12: #{tpu_custom_call.1} parent=1 // pred_region
      %30 = vsyncadd [#allocation4], 0
      %s32 = sshll.u32 [#allocation5], 4
      %s33 = int_to_ptr.vmem [resolvable:$true] %s32
      %s34 = sshll.u32 %s1, 4
      %s35 = int_to_ptr.hbm [resolvable:$true] %s34
      %37 = dma.vmem_to_hbm [thread:$0]  %s33, 256, %s35, [#allocation4]
    $region13: #{tpu_custom_call.1} parent=1 // pred_fallthru
      _
    // Predicated region
    $region14: #{tpu_custom_call.1} parent=1 // pred_check
      _
    $region15: #{tpu_custom_call.1} parent=1 // pred_check_branch
      %39 = sbr.rel (0) target = $region17
    $region16: #{tpu_custom_call.1} parent=1 // pred_region
      %41 = dma.done [#allocation4], 256
    $region17: #{tpu_custom_call.1} parent=1 // pred_fallthru
      _
    %42 = vsyncpa [#allocation3], 1
    %43 = vsyncpa [#allocation4], 1

</llo_original>
